<compile_context>
chip_gen: v6e
topology: v6e:2x2x1
jax: 0.10.0
libtpu: 0.0.40
codegen_flags: <defaults>
</compile_context>

<pallas_src>
import functools

import jax
import jax.numpy as jnp
from jax import lax
from jax.experimental import pallas as pl
from jax.experimental.pallas import tpu as pltpu


def _round_up(n, m):
    return ((n + m - 1) // m) * m


def _mlp_kernel(n_hidden, *refs):
    """refs = [x, w0, b0, ..., w_{n_hidden-1}, b_{n_hidden-1}, w_last_t, b_last, out].

    Hidden layers: h = ReLU(h @ W + b).  Final layer is computed in transposed
    orientation (w_last^T contracted with h on the hidden axis) so the output
    tile is a lane-dense (1, TB) row, then Sigmoid.  All accumulation is f32;
    MXU operands are bf16.
    """
    x_ref = refs[0]
    out_ref = refs[-1]
    params = refs[1:-1]

    h = x_ref[...]                                          # (TB, F) f32
    for li in range(n_hidden):
        w = params[2 * li][...]                             # (in, out) bf16
        b = params[2 * li + 1][...]                         # (1, out)  f32
        h = jnp.dot(h.astype(w.dtype), w,
                    preferred_element_type=jnp.float32) + b
        h = jnp.maximum(h, 0.0)                             # ReLU on VPU (f32)

    w_last_t = params[-2][...]                              # (1, H_last) bf16
    b_last = params[-1][...]                                # (1, 1)      f32
    # (1, H) x (TB, H) contracting on H -> (1, TB): lane-dense output row.
    y = lax.dot_general(w_last_t, h.astype(w_last_t.dtype),
                        dimension_numbers=(((1,), (1,)), ((), ())),
                        preferred_element_type=jnp.float32)
    out_ref[...] = jax.nn.sigmoid(y + b_last)               # Sigmoid (EUP exp + VPU)


def mlp_forward(x, weights, biases, *, block_batch=512, param_dtype=jnp.bfloat16):
    """x: (B, F) f32; weights[i]: (in_i, out_i) f32; biases[i]: (1, out_i) f32."""
    n_linear = len(weights)
    n_hidden = n_linear - 1
    B, F = x.shape
    assert weights[-1].shape[1] == 1, "final layer must have a single output"

    # Batch tile: multiple of 128 when gridded (lane-dense out blocks), else the
    # whole (8-aligned) batch in a single grid step.
    if B > block_batch:
        TB = block_batch
    else:
        TB = _round_up(B, 8)
    B_pad = _round_up(B, TB)
    if B_pad != B:
        x = jnp.pad(x, ((0, B_pad - B), (0, 0)))
    grid = (B_pad // TB,)

    args = [x]
    in_specs = [pl.BlockSpec((TB, F), lambda i: (i, 0))]
    # Hidden-layer params: constant index_map -> resident in VMEM across tiles.
    for li in range(n_hidden):
        w = weights[li].astype(param_dtype)                 # (in, out) bf16
        b = biases[li].astype(jnp.float32)                  # (1, out)  f32
        args += [w, b]
        in_specs += [pl.BlockSpec(w.shape, lambda i: (0, 0)),
                     pl.BlockSpec(b.shape, lambda i: (0, 0))]
    # Final layer passed pre-transposed so the kernel emits a lane-dense row.
    w_last_t = weights[-1].T.astype(param_dtype)            # (1, H_last) bf16
    b_last = biases[-1].astype(jnp.float32)                 # (1, 1)      f32
    args += [w_last_t, b_last]
    in_specs += [pl.BlockSpec(w_last_t.shape, lambda i: (0, 0)),
                 pl.BlockSpec(b_last.shape, lambda i: (0, 0))]

    out_row = pl.pallas_call(
        functools.partial(_mlp_kernel, n_hidden),
        out_shape=jax.ShapeDtypeStruct((1, B_pad), jnp.float32),
        grid=grid,
        in_specs=in_specs,
        out_specs=pl.BlockSpec((1, TB), lambda i: (0, i)),
        compiler_params=pltpu.CompilerParams(
            dimension_semantics=("parallel",)),
    )(*args)

    return out_row[0, :B].reshape(B, 1)


def init_params(key, num_features, n_layers):
    """nn.Linear-style init (uniform +/- 1/sqrt(fan_in)); weights as (in, out)."""
    dims = [num_features] + list(n_layers) + [1]
    weights, biases = [], []
    for i in range(len(dims) - 1):
        fan_in, fan_out = dims[i], dims[i + 1]
        key, kw, kb = jax.random.split(key, 3)
        bound = 1.0 / jnp.sqrt(jnp.float32(fan_in))
        weights.append(jax.random.uniform(kw, (fan_in, fan_out), jnp.float32, -bound, bound))
        biases.append(jax.random.uniform(kb, (1, fan_out), jnp.float32, -bound, bound))
    return weights, biases


def reference_forward(x, weights, biases, param_dtype=jnp.bfloat16):
    """Pure-JAX reference with the same bf16-operand / f32-accumulate recipe."""
    h = x
    n = len(weights)
    for i, (w, b) in enumerate(zip(weights, biases)):
        wq = w.astype(param_dtype)
        h = jnp.dot(h.astype(param_dtype), wq,
                    preferred_element_type=jnp.float32) + b.astype(jnp.float32)
        if i < n - 1:
            h = jnp.maximum(h, 0.0)
        else:
            h = jax.nn.sigmoid(h)
    return h


if __name__ == "__main__":
    num_features = 16
    n_layers = [32, 16]
    batch = 8

    key = jax.random.PRNGKey(0)
    key, kx, kx2 = jax.random.split(key, 3)
    x = jax.random.normal(kx, (batch, num_features), jnp.float32)
    weights, biases = init_params(key, num_features, n_layers)

    # Small batch (single grid step).
    out = mlp_forward(x, weights, biases)
    out = jax.block_until_ready(out)
    ref = reference_forward(x, weights, biases)
    assert out.shape == (batch, 1), out.shape
    assert jnp.allclose(out, ref, atol=1e-4, rtol=1e-4), (out, ref)

    # Larger, non-multiple-of-tile batch to exercise the pipelined grid + padding.
    big_batch = 1030
    x_big = jax.random.normal(kx2, (big_batch, num_features), jnp.float32)
    out_big = jax.block_until_ready(mlp_forward(x_big, weights, biases))
    ref_big = reference_forward(x_big, weights, biases)
    assert out_big.shape == (big_batch, 1), out_big.shape
    assert jnp.allclose(out_big, ref_big, atol=1e-4, rtol=1e-4)

    print("KERNEL_OK")
</pallas_src>

<mosaic_0001>
module attributes {stable_mosaic.version = 11 : i64} {
  func.func @_mlp_kernel(%arg0: i32, %arg1: memref<8x16xf32, #tpu.memory_space<vmem>>, %arg2: memref<16x32xbf16, #tpu.memory_space<vmem>>, %arg3: memref<1x32xf32, #tpu.memory_space<vmem>>, %arg4: memref<32x16xbf16, #tpu.memory_space<vmem>>, %arg5: memref<1x16xf32, #tpu.memory_space<vmem>>, %arg6: memref<1x16xbf16, #tpu.memory_space<vmem>>, %arg7: memref<1x1xf32, #tpu.memory_space<vmem>>, %arg8: memref<1x8xf32, #tpu.memory_space<vmem>>) attributes {dimension_semantics = [#tpu.dimension_semantics<parallel>], iteration_bounds = array<i64: 1>, scalar_prefetch = 0 : i64, scratch_operands = 0 : i64, tpu.core_type = #tpu.core_type<tc>, window_params = [{transform_indices = @transform_0, window_bounds = array<i64: 8, 16>}, {pipeline_mode = #tpu.pipeline_mode<synchronous>, transform_indices = @transform_1, window_bounds = array<i64: 16, 32>}, {pipeline_mode = #tpu.pipeline_mode<synchronous>, transform_indices = @transform_2, window_bounds = array<i64: 1, 32>}, {pipeline_mode = #tpu.pipeline_mode<synchronous>, transform_indices = @transform_3, window_bounds = array<i64: 32, 16>}, {pipeline_mode = #tpu.pipeline_mode<synchronous>, transform_indices = @transform_4, window_bounds = array<i64: 1, 16>}, {pipeline_mode = #tpu.pipeline_mode<synchronous>, transform_indices = @transform_5, window_bounds = array<i64: 1, 16>}, {pipeline_mode = #tpu.pipeline_mode<synchronous>, transform_indices = @transform_6, window_bounds = array<i64: 1, 1>}, {transform_indices = @transform_7, window_bounds = array<i64: 1, 8>}]} {
    %c0 = arith.constant 0 : index
    %c0_0 = arith.constant 0 : index
    %0 = vector.load %arg1[%c0, %c0_0] : memref<8x16xf32, #tpu.memory_space<vmem>>, vector<8x16xf32>
    %c0_1 = arith.constant 0 : index
    %c0_2 = arith.constant 0 : index
    %1 = vector.load %arg2[%c0_1, %c0_2] : memref<16x32xbf16, #tpu.memory_space<vmem>>, vector<16x32xbf16>
    %c0_3 = arith.constant 0 : index
    %c0_4 = arith.constant 0 : index
    %2 = vector.load %arg3[%c0_3, %c0_4] : memref<1x32xf32, #tpu.memory_space<vmem>>, vector<1x32xf32>
    %3 = arith.truncf %0 : vector<8x16xf32> to vector<8x16xbf16>
    %cst = arith.constant dense<0.000000e+00> : vector<8x32xf32>
    %4 = tpu.matmul %3, %1, %cst {dimension_numbers = #tpu.dot_dimension_numbers<[1], [0], [0], [1], [0, 0, 1, 1], [], []>} : vector<8x16xbf16>, vector<16x32xbf16>, vector<8x32xf32> -> vector<8x32xf32>
    %5 = vector.broadcast %2 : vector<1x32xf32> to vector<8x32xf32>
    %6 = arith.addf %4, %5 : vector<8x32xf32>
    %cst_5 = arith.constant 0.000000e+00 : f32
    %7 = vector.broadcast %cst_5 : f32 to vector<8x32xf32>
    %8 = arith.maximumf %6, %7 : vector<8x32xf32>
    %c0_6 = arith.constant 0 : index
    %c0_7 = arith.constant 0 : index
    %9 = vector.load %arg4[%c0_6, %c0_7] : memref<32x16xbf16, #tpu.memory_space<vmem>>, vector<32x16xbf16>
    %c0_8 = arith.constant 0 : index
    %c0_9 = arith.constant 0 : index
    %10 = vector.load %arg5[%c0_8, %c0_9] : memref<1x16xf32, #tpu.memory_space<vmem>>, vector<1x16xf32>
    %11 = arith.truncf %8 : vector<8x32xf32> to vector<8x32xbf16>
    %cst_10 = arith.constant dense<0.000000e+00> : vector<8x16xf32>
    %12 = tpu.matmul %11, %9, %cst_10 {dimension_numbers = #tpu.dot_dimension_numbers<[1], [0], [0], [1], [0, 0, 1, 1], [], []>} : vector<8x32xbf16>, vector<32x16xbf16>, vector<8x16xf32> -> vector<8x16xf32>
    %13 = vector.broadcast %10 : vector<1x16xf32> to vector<8x16xf32>
    %14 = arith.addf %12, %13 : vector<8x16xf32>
    %cst_11 = arith.constant 0.000000e+00 : f32
    %15 = vector.broadcast %cst_11 : f32 to vector<8x16xf32>
    %16 = arith.maximumf %14, %15 : vector<8x16xf32>
    %c0_12 = arith.constant 0 : index
    %c0_13 = arith.constant 0 : index
    %17 = vector.load %arg6[%c0_12, %c0_13] : memref<1x16xbf16, #tpu.memory_space<vmem>>, vector<1x16xbf16>
    %c0_14 = arith.constant 0 : index
    %c0_15 = arith.constant 0 : index
    %18 = vector.load %arg7[%c0_14, %c0_15] : memref<1x1xf32, #tpu.memory_space<vmem>>, vector<1x1xf32>
    %19 = arith.truncf %16 : vector<8x16xf32> to vector<8x16xbf16>
    %cst_16 = arith.constant dense<0.000000e+00> : vector<1x8xf32>
    %20 = tpu.matmul %17, %19, %cst_16 {dimension_numbers = #tpu.dot_dimension_numbers<[1], [1], [0], [0], [0, 0, 1, 0], [], []>} : vector<1x16xbf16>, vector<8x16xbf16>, vector<1x8xf32> -> vector<1x8xf32>
    %21 = vector.broadcast %18 : vector<1x1xf32> to vector<1x8xf32>
    %22 = arith.addf %20, %21 : vector<1x8xf32>
    %23 = arith.negf %22 : vector<1x8xf32>
    %24 = math.exp %23 : vector<1x8xf32>
    %cst_17 = arith.constant 1.000000e+00 : f32
    %25 = vector.broadcast %cst_17 : f32 to vector<1x8xf32>
    %26 = arith.addf %25, %24 : vector<1x8xf32>
    %27 = arith.divf %25, %26 : vector<1x8xf32>
    %c0_18 = arith.constant 0 : index
    %c0_19 = arith.constant 0 : index
    %28 = vector.load %arg8[%c0_18, %c0_19] : memref<1x8xf32, #tpu.memory_space<vmem>>, vector<1x8xf32>
    tpu.vector_store %arg8[%c0_18, %c0_19], %27 {strides = array<i32>} : memref<1x8xf32, #tpu.memory_space<vmem>>, vector<1x8xf32>,
    return
  }
  func.func @transform_0(%arg0: i32) -> (i32, i32) {
    %c0_i32 = arith.constant 0 : i32
    %c0_i32_0 = arith.constant 0 : i32
    return %arg0, %c0_i32 : i32, i32
  }
  func.func @transform_1(%arg0: i32) -> (i32, i32) {
    %c0_i32 = arith.constant 0 : i32
    %c0_i32_0 = arith.constant 0 : i32
    %c0_i32_1 = arith.constant 0 : i32
    return %c0_i32, %c0_i32_0 : i32, i32
  }
  func.func @transform_2(%arg0: i32) -> (i32, i32) {
    %c0_i32 = arith.constant 0 : i32
    %c0_i32_0 = arith.constant 0 : i32
    %c0_i32_1 = arith.constant 0 : i32
    return %c0_i32, %c0_i32_0 : i32, i32
  }
  func.func @transform_3(%arg0: i32) -> (i32, i32) {
    %c0_i32 = arith.constant 0 : i32
    %c0_i32_0 = arith.constant 0 : i32
    %c0_i32_1 = arith.constant 0 : i32
    return %c0_i32, %c0_i32_0 : i32, i32
  }
  func.func @transform_4(%arg0: i32) -> (i32, i32) {
    %c0_i32 = arith.constant 0 : i32
    %c0_i32_0 = arith.constant 0 : i32
    %c0_i32_1 = arith.constant 0 : i32
    return %c0_i32, %c0_i32_0 : i32, i32
  }
  func.func @transform_5(%arg0: i32) -> (i32, i32) {
    %c0_i32 = arith.constant 0 : i32
    %c0_i32_0 = arith.constant 0 : i32
    %c0_i32_1 = arith.constant 0 : i32
    return %c0_i32, %c0_i32_0 : i32, i32
  }
  func.func @transform_6(%arg0: i32) -> (i32, i32) {
    %c0_i32 = arith.constant 0 : i32
    %c0_i32_0 = arith.constant 0 : i32
    %c0_i32_1 = arith.constant 0 : i32
    return %c0_i32, %c0_i32_0 : i32, i32
  }
  func.func @transform_7(%arg0: i32) -> (i32, i32) {
    %c0_i32 = arith.constant 0 : i32
    %c0_i32_0 = arith.constant 0 : i32
    return %c0_i32, %arg0 : i32, i32
  }
}

</mosaic_0001>

<llo_original>
// kernel: tpu_custom_call.1
$region0: #{tpu_custom_call.1}
  #allocation0 [shape = 'u32[]', space=smem, size = 0x4, offset = 0x4, fixed_abs, tag = 'smem constant byte address 0x4 - core index']
  #allocation1 [shape = 'u32[144,128]{1,0:T(1,128)}', space=vmem, size = 0x12000, scoped, tag = 'internal scratch']
  #allocation2 [shape = 'f32[1,1]{1,0:T(1,128)S(1)}', space=vmem, size = 0x200, scoped, tag = 'scoped memory for tpu_custom_call.1']
  %s0 = inlined_call_operand.vmem [shape: f32[8,16], index: 0, kind: input, shape index: {}]
  %s1 = inlined_call_operand.vmem [shape: bf16[16,32], index: 1, kind: input, shape index: {}]
  %s2 = inlined_call_operand.vmem [shape: f32[1,32], index: 2, kind: input, shape index: {}]
  %s3 = inlined_call_operand.vmem [shape: bf16[32,16], index: 3, kind: input, shape index: {}]
  %s4 = inlined_call_operand.vmem [shape: f32[1,16], index: 4, kind: input, shape index: {}]
  %s5 = inlined_call_operand.vmem [shape: bf16[1,16], index: 5, kind: input, shape index: {}]
  %s6 = inlined_call_operand.<no memory space> [shape: f32[1,1], index: 6, kind: input, shape index: {}]
  %s7 = inlined_call_operand.hbm [shape: f32[1,8], index: 7, kind: output, shape index: {}]
  %s8 = sld [smem:[#allocation0]]
  $region38: #{tpu_custom_call.1} parent=0
    _
  %s10 = ssub.s32 1, %s8
  %s11 = scalar_select 0, %s10, %s8
  %v12 = vstv %s6
  %13 = vst [vmem:[#allocation2] sm:$0x1] %v12
  $region1: #{tpu_custom_call.1} parent=0
    #allocation3 [shape = 'u8[512]{0}', space=vmem, size = 0x400, scoped, tag = 'output window, operand 0, single buffered']
    #allocation4 [shape = 's32[1]{0}', space=sflag, size = 0x4, scoped, tag = 'scoped memory for tpu_custom_call.1']
    %14 = vsyncpa [#allocation4], 0
    // Predicated region
    $region2: #{tpu_custom_call.1} parent=1 // pred_check
      _
    $region3: #{tpu_custom_call.1} parent=1 // pred_check_branch
      %16 = sbr.rel (0) target = $region5
    $region4: #{tpu_custom_call.1} parent=1 // pred_region
      _
    $region5: #{tpu_custom_call.1} parent=1 // pred_fallthru
      _
    // Predicated region
    $region6: #{tpu_custom_call.1} parent=1 // pred_check
      _
    $region7: #{tpu_custom_call.1} parent=1 // pred_check_branch
      %18 = sbr.rel (0) target = $region9
    $region8: #{tpu_custom_call.1} parent=1 // pred_region
      _
    $region9: #{tpu_custom_call.1} parent=1 // pred_fallthru
      _
    // Predicated region
    $region10: #{tpu_custom_call.1} parent=1 // pred_check
      _
    $region11: #{tpu_custom_call.1} parent=1 // pred_check_branch
      %20 = sbr.rel (0) target = $region13
    $region12: #{tpu_custom_call.1} parent=1 // pred_region
      _
    $region13: #{tpu_custom_call.1} parent=1 // pred_fallthru
      _
    // Predicated region
    $region14: #{tpu_custom_call.1} parent=1 // pred_check
      _
    $region15: #{tpu_custom_call.1} parent=1 // pred_check_branch
      %22 = sbr.rel (0) target = $region17
    $region16: #{tpu_custom_call.1} parent=1 // pred_region
      _
    $region17: #{tpu_custom_call.1} parent=1 // pred_fallthru
      _
    // Predicated region
    $region18: #{tpu_custom_call.1} parent=1 // pred_check
      _
    $region19: #{tpu_custom_call.1} parent=1 // pred_check_branch
      %24 = sbr.rel (0) target = $region21
    $region20: #{tpu_custom_call.1} parent=1 // pred_region
      _
    $region21: #{tpu_custom_call.1} parent=1 // pred_fallthru
      _
    // Predicated region
    $region22: #{tpu_custom_call.1} parent=1 // pred_check
      _
    $region23: #{tpu_custom_call.1} parent=1 // pred_check_branch
      %26 = sbr.rel (0) target = $region25
    $region24: #{tpu_custom_call.1} parent=1 // pred_region
      _
    $region25: #{tpu_custom_call.1} parent=1 // pred_fallthru
      _
    // Predicated region
    $region26: #{tpu_custom_call.1} parent=1 // pred_check
      _
    $region27: #{tpu_custom_call.1} parent=1 // pred_check_branch
      %28 = sbr.rel (0) target = $region29
    $region28: #{tpu_custom_call.1} parent=1 // pred_region
      _
    $region29: #{tpu_custom_call.1} parent=1 // pred_fallthru
      _
    %v30 = vld [vmem:[%s0] sm:$0xff]
    %v31 = vld [vmem:[%s1] sm:$0xf]
    %v32 = vld [vmem:[%s1 + $0x4] sm:$0xf]
    %v33 = vld [vmem:[%s2] sm:$0x1]
    %v34 = vpack.c.bf16 %v30, %v30
    %v36 = vlaneseq
    %v37 = vshrl.u32 %v36, 7
    %v38 = vsub.s32 0, %v37
    %v39 = vrot.slane %v33, %v38
    %v43 = vunpack.c.l.b16 %v31
    %v44 = vunpack.c.l.b16 %v32
    %v45 = vpack.c.b16 %v44, %v43
    %vm47 = vcmask 130048
    %v49 = vsel %vm47, %v34, 0
    %51 = vmatprep.subr.bf16.mxu0 0
    %52 = vmatpush1.bf16.msra.mxu0 0
    %53 = vmatprep.subr.bf16.mxu0 0
    %54 = vmatpush1.bf16.msra.mxu0 0
    %55 = vmatprep.subr.bf16.mxu0 0
    %56 = vmatpush1.bf16.msra.mxu0 0
    %57 = vmatprep.subr.bf16.mxu0 0
    %58 = vmatpush1.bf16.msra.mxu0 0
    %59 = vmatprep.subr.bf16.mxu0 0
    %60 = vmatpush1.bf16.msra.mxu0 0
    %61 = vmatprep.subr.bf16.mxu0 0
    %62 = vmatpush1.bf16.msra.mxu0 0
    %63 = vmatprep.subr.bf16.mxu0 0
    %64 = vmatpush1.bf16.msra.mxu0 0
    %65 = vmatprep.subr.bf16.mxu0 0
    %66 = vmatpush1.bf16.msra.mxu0 %v45
    %67 = vmatprep.subr.bf16.mxu0 0
    %68 = vmatpush2.bf16.msra.mxu0 0
    %69 = vmatprep.subr.bf16.mxu0 0
    %70 = vmatpush2.bf16.msra.mxu0 0
    %71 = vmatprep.subr.bf16.mxu0 0
    %72 = vmatpush2.bf16.msra.mxu0 0
    %73 = vmatprep.subr.bf16.mxu0 0
    %74 = vmatpush2.bf16.msra.mxu0 0
    %75 = vmatprep.subr.bf16.mxu0 0
    %76 = vmatpush2.bf16.msra.mxu0 0
    %77 = vmatprep.subr.bf16.mxu0 0
    %78 = vmatpush2.bf16.msra.mxu0 0
    %79 = vmatprep.subr.bf16.mxu0 0
    %80 = vmatpush2.bf16.msra.mxu0 0
    %81 = vmatprep.subr.bf16.mxu0 0
    %82 = vmatpush2.bf16.msra.mxu0 0
    %83 = vmatprep.mubr.bf16.mxu0 0
    %84 = vmatmul.mubr.bf16.gmra.mxu0 %v49
    %v85 = vpop.f32.mrf.mxu0
    %v86 = vadd.f32 %v39, %v85
    %v87 = vpop.f32.mrf.mxu0
    %v88 = vpop.f32.mrf.mxu0
    %v89 = vpop.f32.mrf.mxu0
    %90 = vdwg.mxu0
    %v91 = vmax.f32 %v86, 0.0
    %v92 = vld [vmem:[%s3] sm:$0xf]
    %v93 = vld [vmem:[%s3 + $0x4] sm:$0xf]
    %v94 = vld [vmem:[%s3 + $0x8] sm:$0xf]
    %v95 = vld [vmem:[%s3 + $0xc] sm:$0xf]
    %v96 = vld [vmem:[%s4] sm:$0x1]
    %v97 = vpack.c.bf16 %v91, %v91
    %v99 = vlaneseq
    %v100 = vshrl.u32 %v99, 7
    %v101 = vsub.s32 0, %v100
    %v102 = vrot.slane %v96, %v101
    %v108 = vunpack.c.l.b16 %v92
    %v109 = vunpack.c.l.b16 %v93
    %v110 = vunpack.c.l.b16 %v94
    %v111 = vunpack.c.l.b16 %v95
    %v112 = vpack.c.b16 %v109, %v108
    %v113 = vpack.c.b16 %v111, %v110
    %vm116 = vcmask 261120
    %v118 = vsel %vm116, %v97, 0
    %120 = vmatprep.subr.bf16.mxu0 0
    %121 = vmatpush1.bf16.msra.mxu0 0
    %122 = vmatprep.subr.bf16.mxu0 0
    %123 = vmatpush1.bf16.msra.mxu0 0
    %124 = vmatprep.subr.bf16.mxu0 0
    %125 = vmatpush1.bf16.msra.mxu0 0
    %126 = vmatprep.subr.bf16.mxu0 0
    %127 = vmatpush1.bf16.msra.mxu0 0
    %128 = vmatprep.subr.bf16.mxu0 0
    %129 = vmatpush1.bf16.msra.mxu0 0
    %130 = vmatprep.subr.bf16.mxu0 0
    %131 = vmatpush1.bf16.msra.mxu0 0
    %132 = vmatprep.subr.bf16.mxu0 0
    %133 = vmatpush1.bf16.msra.mxu0 %v113
    %134 = vmatprep.subr.bf16.mxu0 0
    %135 = vmatpush1.bf16.msra.mxu0 %v112
    %136 = vmatprep.subr.bf16.mxu0 0
    %137 = vmatpush2.bf16.msra.mxu0 0
    %138 = vmatprep.subr.bf16.mxu0 0
    %139 = vmatpush2.bf16.msra.mxu0 0
    %140 = vmatprep.subr.bf16.mxu0 0
    %141 = vmatpush2.bf16.msra.mxu0 0
    %142 = vmatprep.subr.bf16.mxu0 0
    %143 = vmatpush2.bf16.msra.mxu0 0
    %144 = vmatprep.subr.bf16.mxu0 0
    %145 = vmatpush2.bf16.msra.mxu0 0
    %146 = vmatprep.subr.bf16.mxu0 0
    %147 = vmatpush2.bf16.msra.mxu0 0
    %148 = vmatprep.subr.bf16.mxu0 0
    %149 = vmatpush2.bf16.msra.mxu0 0
    %150 = vmatprep.subr.bf16.mxu0 0
    %151 = vmatpush2.bf16.msra.mxu0 0
    %152 = vmatprep.mubr.bf16.mxu0 0
    %153 = vmatmul.mubr.bf16.gmra.mxu0 %v118
    %v154 = vpop.f32.mrf.mxu0
    %v155 = vadd.f32 %v102, %v154
    %v156 = vpop.f32.mrf.mxu0
    %v157 = vpop.f32.mrf.mxu0
    %v158 = vpop.f32.mrf.mxu0
    %159 = vdwg.mxu0
    %v160 = vmax.f32 %v155, 0.0
    %v161 = vld [vmem:[%s5] sm:$0x1]
    %v162 = vld [vmem:[#allocation2] sm:$0x1]
    %v163 = vpack.c.bf16 %v160, %v160
    %165 = vset.pattern.permute.xlu0 0
    %166 = vperm.xlu0 %165, %v162
    %v167 = vpop.permute.xlu0 %166
    %v169 = vlaneseq
    %v170 = vshrl.u32 %v169, 7
    %v171 = vsub.s32 0, %v170
    %v172 = vrot.slane %v167, %v171
    %v174 = vsel %vm47, %v161, 0
    %v177 = vsel %vm47, %v163, 0
    %179 = vmatprep.subr.bf16.mxu0 0
    %180 = vmatpush1.bf16.xpose.msra.mxu0 0
    %181 = vmatprep.subr.bf16.mxu0 0
    %182 = vmatpush1.bf16.xpose.msra.mxu0 0
    %183 = vmatprep.subr.bf16.mxu0 0
    %184 = vmatpush1.bf16.xpose.msra.mxu0 0
    %185 = vmatprep.subr.bf16.mxu0 0
    %186 = vmatpush1.bf16.xpose.msra.mxu0 0
    %187 = vmatprep.subr.bf16.mxu0 0
    %188 = vmatpush1.bf16.xpose.msra.mxu0 0
    %189 = vmatprep.subr.bf16.mxu0 0
    %190 = vmatpush1.bf16.xpose.msra.mxu0 0
    %191 = vmatprep.subr.bf16.mxu0 0
    %192 = vmatpush1.bf16.xpose.msra.mxu0 0
    %193 = vmatprep.subr.bf16.mxu0 0
    %194 = vmatpush1.bf16.xpose.msra.mxu0 %v177
    %195 = vmatprep.subr.bf16.mxu0 0
    %196 = vmatpush2.bf16.xpose.msra.mxu0 0
    %197 = vmatprep.subr.bf16.mxu0 0
    %198 = vmatpush2.bf16.xpose.msra.mxu0 0
    %199 = vmatprep.subr.bf16.mxu0 0
    %200 = vmatpush2.bf16.xpose.msra.mxu0 0
    %201 = vmatprep.subr.bf16.mxu0 0
    %202 = vmatpush2.bf16.xpose.msra.mxu0 0
    %203 = vmatprep.subr.bf16.mxu0 0
    %204 = vmatpush2.bf16.xpose.msra.mxu0 0
    %205 = vmatprep.subr.bf16.mxu0 0
    %206 = vmatpush2.bf16.xpose.msra.mxu0 0
    %207 = vmatprep.subr.bf16.mxu0 0
    %208 = vmatpush2.bf16.xpose.msra.mxu0 0
    %209 = vmatprep.subr.bf16.mxu0 0
    %210 = vmatpush2.bf16.xpose.msra.mxu0 0
    %211 = vmatprep.mubr.bf16.mxu0 0
    %212 = vmatmul.mubr.bf16.gmra.mxu0 %v174
    %v213 = vpop.f32.mrf.mxu0
    %v214 = vadd.f32 %v172, %v213
    %v215 = vpop.f32.mrf.mxu0
    %v216 = vpop.f32.mrf.mxu0
    %v217 = vpop.f32.mrf.mxu0
    %218 = vdwg.mxu0
    %v219 = vxor.u32 %v214, 2147483648
    %v220 = vmul.f32 %v219, 1.442695
    %v221 = vpow.pop %v220
    %v222 = vadd.f32 %v221, 1.0
    %v223 = vrcp.pop %v222
    %v224 = vmul.f32 1.0, %v223
    %vm225 = vcmask 57344
    %226 = vst.msk [vmem:[#allocation3] sm:$0x1] %vm225, %v224
    // Predicated region
    $region30: #{tpu_custom_call.1} parent=1 // pred_check
      _
    $region31: #{tpu_custom_call.1} parent=1 // pred_check_branch
      %228 = sbr.rel (0) target = $region33
    $region32: #{tpu_custom_call.1} parent=1 // pred_region
      %s230 = ssub.s32 16, 16
      %231 = vsyncadd [#allocation4], %s230
      %s233 = sshll.u32 [#allocation3], 4
      %s234 = int_to_ptr.vmem [resolvable:$true] %s233
      %236 = dma.vmem_to_hbm [thread:$0]  %s234, 16, %s7, [#allocation4]
    $region33: #{tpu_custom_call.1} parent=1 // pred_fallthru
      _
    // Predicated region
    $region34: #{tpu_custom_call.1} parent=1 // pred_check
      _
    $region35: #{tpu_custom_call.1} parent=1 // pred_check_branch
      %238 = sbr.rel (0) target = $region37
    $region36: #{tpu_custom_call.1} parent=1 // pred_region
      %239 = dma.done [#allocation4], 16
    $region37: #{tpu_custom_call.1} parent=1 // pred_fallthru
      _
    %240 = vsyncpa [#allocation4], 1

</llo_original>
